<compile_context>
chip_gen: v7x
topology: tpu7x:2x2x1
jax: 0.10.0
libtpu: 0.0.40
codegen_flags: <defaults>
</compile_context>

<pallas_src>
import functools

import jax
import jax.numpy as jnp
from jax.experimental import pallas as pl
from jax.experimental.pallas import tpu as pltpu

BN_EPS = 1e-5


# ---------------------------------------------------------------------------
# Fused Pallas kernel: conv1 -> max/BN/ReLU -> conv2 -> ... -> conv3 -> max/BN/ReLU
# ---------------------------------------------------------------------------
def make_fused_kernel(B, N, L, mxu_dtype):
    BL = B * L            # lanes of a "max" tensor
    GL = B * N * L        # lanes of an "own" tensor (lane = n*B*L + b*L + l)

    def kernel(x_ref, adjt_ref, w1t_ref, b1_ref,
               w2to_ref, w2tm_ref, b2_ref,
               w3to_ref, w3tm_ref, b3_ref, o_ref):

        # Shared block-diagonal adj^T, loaded once and reused by all 3 layers.
        adjt = adjt_ref[...]                                      # (GL, GL)

        def mm(a, b):
            # Single 2D MXU matmul, f32 accumulation.
            return jnp.dot(a, b, preferred_element_type=jnp.float32)

        def node_mix_bias(xw, bias):
            # adj @ (X W) for ALL graphs at once: channels-first right-multiply
            # by the block-diagonal adj^T, then per-channel bias add in f32.
            return mm(xw.astype(mxu_dtype), adjt) + bias           # (C, GL) f32

        def max_over_n(h):
            # n-major lane order: graphs sharing b occupy the same lane slot of
            # each contiguous BL-lane block, so max over N is N-1 elementwise
            # maxima of static lane slices.
            m = h[:, 0:BL]
            for nn in range(1, N):
                m = jnp.maximum(m, h[:, nn * BL:(nn + 1) * BL])
            return m                                               # (C, BL)

        def tile_n(t):
            # Replicate a (C, BL) tensor over the N axis of the lane ordering.
            return jnp.concatenate([t] * N, axis=-1)               # (C, GL)

        def bn_relu(t):
            # Train-mode BatchNorm1d per channel row: biased variance, two-pass
            # (numerically safer than E[x^2]-mean^2), all f32; then ReLU.
            cnt = float(t.shape[1])
            mean = jnp.sum(t, axis=1, keepdims=True) / cnt         # (C, 1)
            d = t - mean
            var = jnp.sum(d * d, axis=1, keepdims=True) / cnt
            return jnp.maximum(d * jax.lax.rsqrt(var + BN_EPS), 0.0)

        def max_bn_relu(h):
            # BN stats on h (over G*L) and on the UN-replicated max (over B*L):
            # replicating over N changes neither the mean nor the biased
            # variance, so this equals BN over the concatenated channels.
            return bn_relu(h), bn_relu(max_over_n(h))

        # ---- layer 1: GCNConv(C0 -> C1) + max / BN / ReLU --------------------
        h = node_mix_bias(mm(w1t_ref[...], x_ref[...]), b1_ref[...])  # (C1, GL)
        y_own, y_max = max_bn_relu(h)                    # (C1, GL), (C1, BL)

        # ---- layer 2: GCNConv(2*C1 -> C2) + max / BN / ReLU ------------------
        # Input channels are [own | max]; the weight is split so the max half
        # is multiplied once per batch element, then tiled over N (no concat).
        # (On v7x the two dots can accumulate in the MXU result buffer.)
        xw = mm(w2to_ref[...], y_own.astype(mxu_dtype)) + tile_n(
            mm(w2tm_ref[...], y_max.astype(mxu_dtype)))            # (C2, GL) f32
        h = node_mix_bias(xw, b2_ref[...])
        y_own, y_max = max_bn_relu(h)

        # ---- layer 3: GCNConv(2*C2 -> C3) + max / BN / ReLU ------------------
        xw = mm(w3to_ref[...], y_own.astype(mxu_dtype)) + tile_n(
            mm(w3tm_ref[...], y_max.astype(mxu_dtype)))            # (C3, GL) f32
        h = node_mix_bias(xw, b3_ref[...])
        y_own, y_max = max_bn_relu(h)

        # ---- output: [own ; max tiled over N] along channel rows -------------
        C3 = y_own.shape[0]
        o_ref[:C3, :] = y_own
        o_ref[C3:, :] = tile_n(y_max)

    return kernel


# ---------------------------------------------------------------------------
# Wrapper: one fused pallas_call for the whole block
# ---------------------------------------------------------------------------
def pick_mxu_dtype():
    """bf16 MXU operands on v6e / v7x (2x MXU rate, half vreg/DMA bytes);
    f32 elsewhere (v5e has no bf16 VPU path; f32 MXU is fine at this size)."""
    try:
        kind = jax.devices()[0].device_kind.lower()
    except Exception:
        return jnp.float32
    if any(tag in kind for tag in ("v6", "v7", "7x", "trillium")):
        return jnp.bfloat16
    return jnp.float32


def aittala_gcn1d_block(x_bncl, adj, params, *, mxu_dtype=jnp.float32):
    """x_bncl: (B, N, C0, L) -- PyTorch input layout.  Returns (B*N, 2*C3, L)."""
    b, n, c0, l = x_bncl.shape
    g = b * n
    (w1, b1), (w2, b2), (w3, b3) = params
    c1, c2, c3 = w1.shape[1], w2.shape[1], w3.shape[1]
    f32 = jnp.float32

    # Lane-dense channels-first layout: (C0, G*L), lane index = n*B*L + b*L + l.
    x_cf = jnp.transpose(x_bncl.astype(f32), (2, 1, 0, 3)).reshape(c0, g * l)

    # Shared block-diagonal adj^T: node mixing for ALL graphs is one 2D matmul
    # (every graph uses the same edge_index / normalized adjacency).
    adjt_bd = jnp.kron(jnp.eye(g, dtype=f32), adj.T.astype(f32))   # (G*L, G*L)

    # Parameter re-layout (tiny, one-time): transposed weights for channels-first
    # matmuls, split into [own | max] input-channel halves, biases as (C, 1).
    args = (
        x_cf.astype(mxu_dtype),
        adjt_bd.astype(mxu_dtype),
        w1.T.astype(mxu_dtype), b1.reshape(c1, 1).astype(f32),
        w2[:c1].T.astype(mxu_dtype), w2[c1:].T.astype(mxu_dtype),
        b2.reshape(c2, 1).astype(f32),
        w3[:c2].T.astype(mxu_dtype), w3[c2:].T.astype(mxu_dtype),
        b3.reshape(c3, 1).astype(f32),
    )

    out_cf = pl.pallas_call(
        make_fused_kernel(b, n, l, mxu_dtype),
        out_shape=jax.ShapeDtypeStruct((2 * c3, g * l), jnp.float32),
        # Working set ~0.2 MiB: single invocation, full-array VMEM blocks, no
        # grid (BatchNorm needs global batch statistics anyway), default
        # scoped-VMEM limit is ample on all generations.
        in_specs=[pl.BlockSpec(memory_space=pltpu.MemorySpace.VMEM)] * len(args),
        out_specs=pl.BlockSpec(memory_space=pltpu.MemorySpace.VMEM),
    )(*args)

    # Tiny relayout back to the PyTorch (B*N, 2*C3, L) layout (row = b*N + n).
    out = jnp.transpose(out_cf.reshape(2 * c3, n, b, l), (2, 1, 0, 3))
    return out.reshape(g, 2 * c3, l)


# ---------------------------------------------------------------------------
# Glue: normalized adjacency + deterministic parameter init
# ---------------------------------------------------------------------------
def gcn_norm_dense(edge_index, num_nodes, improved=True):
    A = jnp.zeros((num_nodes, num_nodes), jnp.float32)
    A = A.at[edge_index[0], edge_index[1]].add(1.0)
    A = A + (2.0 if improved else 1.0) * jnp.eye(num_nodes, dtype=jnp.float32)
    deg = jnp.sum(A, axis=0)
    dinv = jax.lax.rsqrt(deg)
    return A * dinv[:, None] * dinv[None, :]


def xavier_normal(key, fan_in, fan_out):
    std = (2.0 / (fan_in + fan_out)) ** 0.5
    return std * jax.random.normal(key, (fan_in, fan_out), jnp.float32)


# ---------------------------------------------------------------------------
# Pure-JAX reference (original concat/broadcast formulation) for sanity check
# ---------------------------------------------------------------------------
def reference_block(x_bncl, adj, params):
    x = jnp.transpose(x_bncl, (0, 1, 3, 2)).astype(jnp.float32)
    for (w, bias) in params:
        h = jnp.einsum("ij,bnjc->bnic", adj,
                       jnp.einsum("bnlc,cd->bnld", x, w)) + bias
        hmax = jnp.broadcast_to(jnp.max(h, axis=1, keepdims=True), h.shape)
        hc = jnp.concatenate([h, hmax], axis=-1)
        mean = jnp.mean(hc, axis=(0, 1, 2), keepdims=True)
        var = jnp.mean(jnp.square(hc - mean), axis=(0, 1, 2), keepdims=True)
        x = jnp.maximum((hc - mean) * jax.lax.rsqrt(var + BN_EPS), 0.0)
    b, n, l, c2 = x.shape
    return jnp.transpose(x.reshape(b * n, l, c2), (0, 2, 1))


if __name__ == "__main__":
    # Small shapes consistent with the module's forward.
    B, N, L = 2, 3, 16
    channels = [4, 8, 16, 16]            # channels[0..3]

    key = jax.random.PRNGKey(0)
    kx, k1, k2, k3 = jax.random.split(key, 4)

    # Input in the PyTorch layout (B, N, C0, L).
    x = jax.random.normal(kx, (B, N, channels[0], L), jnp.float32)

    # Shared chain graph over L nodes (symmetric edge_index), as in the PyTorch call.
    src = jnp.arange(L - 1, dtype=jnp.int32)
    edge_index = jnp.stack(
        [jnp.concatenate([src, src + 1]), jnp.concatenate([src + 1, src])]
    )                                                   # (2, 2*(L-1))
    adj = gcn_norm_dense(edge_index, L, improved=True)  # dense D^-1/2 (A+2I) D^-1/2

    # Deterministic parameters: xavier_normal weights, zero biases (PyG default).
    params = [
        (xavier_normal(k1, channels[0], channels[1]),
         jnp.zeros((channels[1],), jnp.float32)),
        (xavier_normal(k2, 2 * channels[1], channels[2]),
         jnp.zeros((channels[2],), jnp.float32)),
        (xavier_normal(k3, 2 * channels[2], channels[3]),
         jnp.zeros((channels[3],), jnp.float32)),
    ]

    mxu_dtype = pick_mxu_dtype()
    fwd = jax.jit(functools.partial(aittala_gcn1d_block, mxu_dtype=mxu_dtype))
    out = jax.block_until_ready(fwd(x, adj, params))

    ref = reference_block(x, adj, params)
    # bf16 MXU operands (v6e/v7x) round inputs to ~2^-9 relative; BN keeps the
    # activations O(1), so a 5e-2 tolerance is ample.  f32 path stays at 1e-3.
    tol = 5e-2 if mxu_dtype is jnp.bfloat16 else 1e-3
    assert out.shape == (B * N, 2 * channels[3], L), out.shape
    assert jnp.allclose(out, ref, rtol=tol, atol=tol), "mismatch vs reference"

    print("KERNEL_OK")
</pallas_src>

<mosaic_0001>
module attributes {stable_mosaic.version = 11 : i64} {
  func.func @kernel(%arg0: memref<4x96xf32, #tpu.memory_space<vmem>>, %arg1: memref<96x96xf32, #tpu.memory_space<vmem>>, %arg2: memref<8x4xf32, #tpu.memory_space<vmem>>, %arg3: memref<8x1xf32, #tpu.memory_space<vmem>>, %arg4: memref<16x8xf32, #tpu.memory_space<vmem>>, %arg5: memref<16x8xf32, #tpu.memory_space<vmem>>, %arg6: memref<16x1xf32, #tpu.memory_space<vmem>>, %arg7: memref<16x16xf32, #tpu.memory_space<vmem>>, %arg8: memref<16x16xf32, #tpu.memory_space<vmem>>, %arg9: memref<16x1xf32, #tpu.memory_space<vmem>>, %arg10: memref<32x96xf32, #tpu.memory_space<vmem>>) attributes {dimension_semantics = [], scalar_prefetch = 0 : i64, scratch_operands = 0 : i64, tpu.core_type = #tpu.core_type<tc>} {
    %c0 = arith.constant 0 : index
    %c0_0 = arith.constant 0 : index
    %0 = vector.load %arg1[%c0, %c0_0] : memref<96x96xf32, #tpu.memory_space<vmem>>, vector<96x96xf32>
    %c0_1 = arith.constant 0 : index
    %c0_2 = arith.constant 0 : index
    %1 = vector.load %arg2[%c0_1, %c0_2] : memref<8x4xf32, #tpu.memory_space<vmem>>, vector<8x4xf32>
    %c0_3 = arith.constant 0 : index
    %c0_4 = arith.constant 0 : index
    %2 = vector.load %arg0[%c0_3, %c0_4] : memref<4x96xf32, #tpu.memory_space<vmem>>, vector<4x96xf32>
    %cst = arith.constant dense<0.000000e+00> : vector<8x96xf32>
    %3 = tpu.matmul %1, %2, %cst {dimension_numbers = #tpu.dot_dimension_numbers<[1], [0], [0], [1], [0, 0, 1, 1], [], []>} : vector<8x4xf32>, vector<4x96xf32>, vector<8x96xf32> -> vector<8x96xf32>
    %c0_5 = arith.constant 0 : index
    %c0_6 = arith.constant 0 : index
    %4 = vector.load %arg3[%c0_5, %c0_6] : memref<8x1xf32, #tpu.memory_space<vmem>>, vector<8x1xf32>
    %cst_7 = arith.constant dense<0.000000e+00> : vector<8x96xf32>
    %5 = tpu.matmul %3, %0, %cst_7 {dimension_numbers = #tpu.dot_dimension_numbers<[1], [0], [0], [1], [0, 0, 1, 1], [], []>} : vector<8x96xf32>, vector<96x96xf32>, vector<8x96xf32> -> vector<8x96xf32>
    %6 = vector.broadcast %4 : vector<8x1xf32> to vector<8x96xf32>
    %7 = arith.addf %5, %6 : vector<8x96xf32>
    %cst_8 = arith.constant dense<0.000000e+00> : vector<8xf32>
    %8 = vector.multi_reduction <add>, %7, %cst_8 [1] : vector<8x96xf32> to vector<8xf32>
    %9 = vector.shape_cast %8 : vector<8xf32> to vector<8x1xf32>
    %cst_9 = arith.constant 9.600000e+01 : f32
    %10 = vector.broadcast %cst_9 : f32 to vector<8x1xf32>
    %11 = arith.divf %9, %10 : vector<8x1xf32>
    %12 = vector.broadcast %11 : vector<8x1xf32> to vector<8x96xf32>
    %13 = arith.subf %7, %12 : vector<8x96xf32>
    %14 = arith.mulf %13, %13 : vector<8x96xf32>
    %cst_10 = arith.constant dense<0.000000e+00> : vector<8xf32>
    %15 = vector.multi_reduction <add>, %14, %cst_10 [1] : vector<8x96xf32> to vector<8xf32>
    %16 = vector.shape_cast %15 : vector<8xf32> to vector<8x1xf32>
    %cst_11 = arith.constant 9.600000e+01 : f32
    %17 = vector.broadcast %cst_11 : f32 to vector<8x1xf32>
    %18 = arith.divf %16, %17 : vector<8x1xf32>
    %cst_12 = arith.constant 9.99999974E-6 : f32
    %19 = vector.broadcast %cst_12 : f32 to vector<8x1xf32>
    %20 = arith.addf %18, %19 : vector<8x1xf32>
    %21 = math.rsqrt %20 : vector<8x1xf32>
    %22 = vector.broadcast %21 : vector<8x1xf32> to vector<8x96xf32>
    %23 = arith.mulf %13, %22 : vector<8x96xf32>
    %cst_13 = arith.constant 0.000000e+00 : f32
    %24 = vector.broadcast %cst_13 : f32 to vector<8x96xf32>
    %25 = arith.maximumf %23, %24 : vector<8x96xf32>
    %26 = vector.extract_strided_slice %7 {offsets = [0, 0], sizes = [8, 32], strides = [1, 1]} : vector<8x96xf32> to vector<8x32xf32>
    %27 = vector.extract_strided_slice %7 {offsets = [0, 32], sizes = [8, 32], strides = [1, 1]} : vector<8x96xf32> to vector<8x32xf32>
    %28 = arith.maximumf %26, %27 : vector<8x32xf32>
    %29 = vector.extract_strided_slice %7 {offsets = [0, 64], sizes = [8, 32], strides = [1, 1]} : vector<8x96xf32> to vector<8x32xf32>
    %30 = arith.maximumf %28, %29 : vector<8x32xf32>
    %cst_14 = arith.constant dense<0.000000e+00> : vector<8xf32>
    %31 = vector.multi_reduction <add>, %30, %cst_14 [1] : vector<8x32xf32> to vector<8xf32>
    %32 = vector.shape_cast %31 : vector<8xf32> to vector<8x1xf32>
    %cst_15 = arith.constant 3.200000e+01 : f32
    %33 = vector.broadcast %cst_15 : f32 to vector<8x1xf32>
    %34 = arith.divf %32, %33 : vector<8x1xf32>
    %35 = vector.broadcast %34 : vector<8x1xf32> to vector<8x32xf32>
    %36 = arith.subf %30, %35 : vector<8x32xf32>
    %37 = arith.mulf %36, %36 : vector<8x32xf32>
    %cst_16 = arith.constant dense<0.000000e+00> : vector<8xf32>
    %38 = vector.multi_reduction <add>, %37, %cst_16 [1] : vector<8x32xf32> to vector<8xf32>
    %39 = vector.shape_cast %38 : vector<8xf32> to vector<8x1xf32>
    %cst_17 = arith.constant 3.200000e+01 : f32
    %40 = vector.broadcast %cst_17 : f32 to vector<8x1xf32>
    %41 = arith.divf %39, %40 : vector<8x1xf32>
    %cst_18 = arith.constant 9.99999974E-6 : f32
    %42 = vector.broadcast %cst_18 : f32 to vector<8x1xf32>
    %43 = arith.addf %41, %42 : vector<8x1xf32>
    %44 = math.rsqrt %43 : vector<8x1xf32>
    %45 = vector.broadcast %44 : vector<8x1xf32> to vector<8x32xf32>
    %46 = arith.mulf %36, %45 : vector<8x32xf32>
    %cst_19 = arith.constant 0.000000e+00 : f32
    %47 = vector.broadcast %cst_19 : f32 to vector<8x32xf32>
    %48 = arith.maximumf %46, %47 : vector<8x32xf32>
    %c0_20 = arith.constant 0 : index
    %c0_21 = arith.constant 0 : index
    %49 = vector.load %arg4[%c0_20, %c0_21] : memref<16x8xf32, #tpu.memory_space<vmem>>, vector<16x8xf32>
    %cst_22 = arith.constant dense<0.000000e+00> : vector<16x96xf32>
    %50 = tpu.matmul %49, %25, %cst_22 {dimension_numbers = #tpu.dot_dimension_numbers<[1], [0], [0], [1], [0, 0, 1, 1], [], []>} : vector<16x8xf32>, vector<8x96xf32>, vector<16x96xf32> -> vector<16x96xf32>
    %c0_23 = arith.constant 0 : index
    %c0_24 = arith.constant 0 : index
    %51 = vector.load %arg5[%c0_23, %c0_24] : memref<16x8xf32, #tpu.memory_space<vmem>>, vector<16x8xf32>
    %cst_25 = arith.constant dense<0.000000e+00> : vector<16x32xf32>
    %52 = tpu.matmul %51, %48, %cst_25 {dimension_numbers = #tpu.dot_dimension_numbers<[1], [0], [0], [1], [0, 0, 1, 1], [], []>} : vector<16x8xf32>, vector<8x32xf32>, vector<16x32xf32> -> vector<16x32xf32>
    %53 = tpu.concatenate %52, %52, %52 in 1 : vector<16x32xf32>, vector<16x32xf32>, vector<16x32xf32> -> vector<16x96xf32>
    %54 = arith.addf %50, %53 : vector<16x96xf32>
    %c0_26 = arith.constant 0 : index
    %c0_27 = arith.constant 0 : index
    %55 = vector.load %arg6[%c0_26, %c0_27] : memref<16x1xf32, #tpu.memory_space<vmem>>, vector<16x1xf32>
    %cst_28 = arith.constant dense<0.000000e+00> : vector<16x96xf32>
    %56 = tpu.matmul %54, %0, %cst_28 {dimension_numbers = #tpu.dot_dimension_numbers<[1], [0], [0], [1], [0, 0, 1, 1], [], []>} : vector<16x96xf32>, vector<96x96xf32>, vector<16x96xf32> -> vector<16x96xf32>
    %57 = vector.broadcast %55 : vector<16x1xf32> to vector<16x96xf32>
    %58 = arith.addf %56, %57 : vector<16x96xf32>
    %cst_29 = arith.constant dense<0.000000e+00> : vector<16xf32>
    %59 = vector.multi_reduction <add>, %58, %cst_29 [1] : vector<16x96xf32> to vector<16xf32>
    %60 = vector.shape_cast %59 : vector<16xf32> to vector<16x1xf32>
    %cst_30 = arith.constant 9.600000e+01 : f32
    %61 = vector.broadcast %cst_30 : f32 to vector<16x1xf32>
    %62 = arith.divf %60, %61 : vector<16x1xf32>
    %63 = vector.broadcast %62 : vector<16x1xf32> to vector<16x96xf32>
    %64 = arith.subf %58, %63 : vector<16x96xf32>
    %65 = arith.mulf %64, %64 : vector<16x96xf32>
    %cst_31 = arith.constant dense<0.000000e+00> : vector<16xf32>
    %66 = vector.multi_reduction <add>, %65, %cst_31 [1] : vector<16x96xf32> to vector<16xf32>
    %67 = vector.shape_cast %66 : vector<16xf32> to vector<16x1xf32>
    %cst_32 = arith.constant 9.600000e+01 : f32
    %68 = vector.broadcast %cst_32 : f32 to vector<16x1xf32>
    %69 = arith.divf %67, %68 : vector<16x1xf32>
    %cst_33 = arith.constant 9.99999974E-6 : f32
    %70 = vector.broadcast %cst_33 : f32 to vector<16x1xf32>
    %71 = arith.addf %69, %70 : vector<16x1xf32>
    %72 = math.rsqrt %71 : vector<16x1xf32>
    %73 = vector.broadcast %72 : vector<16x1xf32> to vector<16x96xf32>
    %74 = arith.mulf %64, %73 : vector<16x96xf32>
    %cst_34 = arith.constant 0.000000e+00 : f32
    %75 = vector.broadcast %cst_34 : f32 to vector<16x96xf32>
    %76 = arith.maximumf %74, %75 : vector<16x96xf32>
    %77 = vector.extract_strided_slice %58 {offsets = [0, 0], sizes = [16, 32], strides = [1, 1]} : vector<16x96xf32> to vector<16x32xf32>
    %78 = vector.extract_strided_slice %58 {offsets = [0, 32], sizes = [16, 32], strides = [1, 1]} : vector<16x96xf32> to vector<16x32xf32>
    %79 = arith.maximumf %77, %78 : vector<16x32xf32>
    %80 = vector.extract_strided_slice %58 {offsets = [0, 64], sizes = [16, 32], strides = [1, 1]} : vector<16x96xf32> to vector<16x32xf32>
    %81 = arith.maximumf %79, %80 : vector<16x32xf32>
    %cst_35 = arith.constant dense<0.000000e+00> : vector<16xf32>
    %82 = vector.multi_reduction <add>, %81, %cst_35 [1] : vector<16x32xf32> to vector<16xf32>
    %83 = vector.shape_cast %82 : vector<16xf32> to vector<16x1xf32>
    %cst_36 = arith.constant 3.200000e+01 : f32
    %84 = vector.broadcast %cst_36 : f32 to vector<16x1xf32>
    %85 = arith.divf %83, %84 : vector<16x1xf32>
    %86 = vector.broadcast %85 : vector<16x1xf32> to vector<16x32xf32>
    %87 = arith.subf %81, %86 : vector<16x32xf32>
    %88 = arith.mulf %87, %87 : vector<16x32xf32>
    %cst_37 = arith.constant dense<0.000000e+00> : vector<16xf32>
    %89 = vector.multi_reduction <add>, %88, %cst_37 [1] : vector<16x32xf32> to vector<16xf32>
    %90 = vector.shape_cast %89 : vector<16xf32> to vector<16x1xf32>
    %cst_38 = arith.constant 3.200000e+01 : f32
    %91 = vector.broadcast %cst_38 : f32 to vector<16x1xf32>
    %92 = arith.divf %90, %91 : vector<16x1xf32>
    %cst_39 = arith.constant 9.99999974E-6 : f32
    %93 = vector.broadcast %cst_39 : f32 to vector<16x1xf32>
    %94 = arith.addf %92, %93 : vector<16x1xf32>
    %95 = math.rsqrt %94 : vector<16x1xf32>
    %96 = vector.broadcast %95 : vector<16x1xf32> to vector<16x32xf32>
    %97 = arith.mulf %87, %96 : vector<16x32xf32>
    %cst_40 = arith.constant 0.000000e+00 : f32
    %98 = vector.broadcast %cst_40 : f32 to vector<16x32xf32>
    %99 = arith.maximumf %97, %98 : vector<16x32xf32>
    %c0_41 = arith.constant 0 : index
    %c0_42 = arith.constant 0 : index
    %100 = vector.load %arg7[%c0_41, %c0_42] : memref<16x16xf32, #tpu.memory_space<vmem>>, vector<16x16xf32>
    %cst_43 = arith.constant dense<0.000000e+00> : vector<16x96xf32>
    %101 = tpu.matmul %100, %76, %cst_43 {dimension_numbers = #tpu.dot_dimension_numbers<[1], [0], [0], [1], [0, 0, 1, 1], [], []>} : vector<16x16xf32>, vector<16x96xf32>, vector<16x96xf32> -> vector<16x96xf32>
    %c0_44 = arith.constant 0 : index
    %c0_45 = arith.constant 0 : index
    %102 = vector.load %arg8[%c0_44, %c0_45] : memref<16x16xf32, #tpu.memory_space<vmem>>, vector<16x16xf32>
    %cst_46 = arith.constant dense<0.000000e+00> : vector<16x32xf32>
    %103 = tpu.matmul %102, %99, %cst_46 {dimension_numbers = #tpu.dot_dimension_numbers<[1], [0], [0], [1], [0, 0, 1, 1], [], []>} : vector<16x16xf32>, vector<16x32xf32>, vector<16x32xf32> -> vector<16x32xf32>
    %104 = tpu.concatenate %103, %103, %103 in 1 : vector<16x32xf32>, vector<16x32xf32>, vector<16x32xf32> -> vector<16x96xf32>
    %105 = arith.addf %101, %104 : vector<16x96xf32>
    %c0_47 = arith.constant 0 : index
    %c0_48 = arith.constant 0 : index
    %106 = vector.load %arg9[%c0_47, %c0_48] : memref<16x1xf32, #tpu.memory_space<vmem>>, vector<16x1xf32>
    %cst_49 = arith.constant dense<0.000000e+00> : vector<16x96xf32>
    %107 = tpu.matmul %105, %0, %cst_49 {dimension_numbers = #tpu.dot_dimension_numbers<[1], [0], [0], [1], [0, 0, 1, 1], [], []>} : vector<16x96xf32>, vector<96x96xf32>, vector<16x96xf32> -> vector<16x96xf32>
    %108 = vector.broadcast %106 : vector<16x1xf32> to vector<16x96xf32>
    %109 = arith.addf %107, %108 : vector<16x96xf32>
    %cst_50 = arith.constant dense<0.000000e+00> : vector<16xf32>
    %110 = vector.multi_reduction <add>, %109, %cst_50 [1] : vector<16x96xf32> to vector<16xf32>
    %111 = vector.shape_cast %110 : vector<16xf32> to vector<16x1xf32>
    %cst_51 = arith.constant 9.600000e+01 : f32
    %112 = vector.broadcast %cst_51 : f32 to vector<16x1xf32>
    %113 = arith.divf %111, %112 : vector<16x1xf32>
    %114 = vector.broadcast %113 : vector<16x1xf32> to vector<16x96xf32>
    %115 = arith.subf %109, %114 : vector<16x96xf32>
    %116 = arith.mulf %115, %115 : vector<16x96xf32>
    %cst_52 = arith.constant dense<0.000000e+00> : vector<16xf32>
    %117 = vector.multi_reduction <add>, %116, %cst_52 [1] : vector<16x96xf32> to vector<16xf32>
    %118 = vector.shape_cast %117 : vector<16xf32> to vector<16x1xf32>
    %cst_53 = arith.constant 9.600000e+01 : f32
    %119 = vector.broadcast %cst_53 : f32 to vector<16x1xf32>
    %120 = arith.divf %118, %119 : vector<16x1xf32>
    %cst_54 = arith.constant 9.99999974E-6 : f32
    %121 = vector.broadcast %cst_54 : f32 to vector<16x1xf32>
    %122 = arith.addf %120, %121 : vector<16x1xf32>
    %123 = math.rsqrt %122 : vector<16x1xf32>
    %124 = vector.broadcast %123 : vector<16x1xf32> to vector<16x96xf32>
    %125 = arith.mulf %115, %124 : vector<16x96xf32>
    %cst_55 = arith.constant 0.000000e+00 : f32
    %126 = vector.broadcast %cst_55 : f32 to vector<16x96xf32>
    %127 = arith.maximumf %125, %126 : vector<16x96xf32>
    %128 = vector.extract_strided_slice %109 {offsets = [0, 0], sizes = [16, 32], strides = [1, 1]} : vector<16x96xf32> to vector<16x32xf32>
    %129 = vector.extract_strided_slice %109 {offsets = [0, 32], sizes = [16, 32], strides = [1, 1]} : vector<16x96xf32> to vector<16x32xf32>
    %130 = arith.maximumf %128, %129 : vector<16x32xf32>
    %131 = vector.extract_strided_slice %109 {offsets = [0, 64], sizes = [16, 32], strides = [1, 1]} : vector<16x96xf32> to vector<16x32xf32>
    %132 = arith.maximumf %130, %131 : vector<16x32xf32>
    %cst_56 = arith.constant dense<0.000000e+00> : vector<16xf32>
    %133 = vector.multi_reduction <add>, %132, %cst_56 [1] : vector<16x32xf32> to vector<16xf32>
    %134 = vector.shape_cast %133 : vector<16xf32> to vector<16x1xf32>
    %cst_57 = arith.constant 3.200000e+01 : f32
    %135 = vector.broadcast %cst_57 : f32 to vector<16x1xf32>
    %136 = arith.divf %134, %135 : vector<16x1xf32>
    %137 = vector.broadcast %136 : vector<16x1xf32> to vector<16x32xf32>
    %138 = arith.subf %132, %137 : vector<16x32xf32>
    %139 = arith.mulf %138, %138 : vector<16x32xf32>
    %cst_58 = arith.constant dense<0.000000e+00> : vector<16xf32>
    %140 = vector.multi_reduction <add>, %139, %cst_58 [1] : vector<16x32xf32> to vector<16xf32>
    %141 = vector.shape_cast %140 : vector<16xf32> to vector<16x1xf32>
    %cst_59 = arith.constant 3.200000e+01 : f32
    %142 = vector.broadcast %cst_59 : f32 to vector<16x1xf32>
    %143 = arith.divf %141, %142 : vector<16x1xf32>
    %cst_60 = arith.constant 9.99999974E-6 : f32
    %144 = vector.broadcast %cst_60 : f32 to vector<16x1xf32>
    %145 = arith.addf %143, %144 : vector<16x1xf32>
    %146 = math.rsqrt %145 : vector<16x1xf32>
    %147 = vector.broadcast %146 : vector<16x1xf32> to vector<16x32xf32>
    %148 = arith.mulf %138, %147 : vector<16x32xf32>
    %cst_61 = arith.constant 0.000000e+00 : f32
    %149 = vector.broadcast %cst_61 : f32 to vector<16x32xf32>
    %150 = arith.maximumf %148, %149 : vector<16x32xf32>
    %c0_62 = arith.constant 0 : index
    %c0_63 = arith.constant 0 : index
    %151 = vector.load %arg10[%c0_62, %c0_63] : memref<32x96xf32, #tpu.memory_space<vmem>>, vector<16x96xf32>
    tpu.vector_store %arg10[%c0_62, %c0_63], %127 {strides = array<i32>} : memref<32x96xf32, #tpu.memory_space<vmem>>, vector<16x96xf32>,
    %152 = tpu.concatenate %150, %150, %150 in 1 : vector<16x32xf32>, vector<16x32xf32>, vector<16x32xf32> -> vector<16x96xf32>
    %c16 = arith.constant 16 : index
    %c0_64 = arith.constant 0 : index
    %153 = vector.load %arg10[%c16, %c0_64] : memref<32x96xf32, #tpu.memory_space<vmem>>, vector<16x96xf32>
    tpu.vector_store %arg10[%c16, %c0_64], %152 {strides = array<i32>} : memref<32x96xf32, #tpu.memory_space<vmem>>, vector<16x96xf32>,
    return
  }
}

</mosaic_0001>

<llo_original>
// kernel: aittala_gcn1d_block.1
$region0: #{aittala_gcn1d_block.1}
  #allocation0 [shape = 'u32[]', space=smem, size = 0x4, offset = 0x4, fixed_abs, tag = 'smem constant byte address 0x4 - core index']
  #allocation1 [shape = 'u32[144,128]{1,0:T(1,128)}', space=vmem, size = 0x12000, scoped, tag = 'internal scratch']
  %s0 = inlined_call_operand.vmem [shape: f32[4,96], index: 0, kind: input, shape index: {}]
  %s1 = inlined_call_operand.vmem [shape: f32[96,96], index: 1, kind: input, shape index: {}]
  %s2 = inlined_call_operand.vmem [shape: f32[8,4], index: 2, kind: input, shape index: {}]
  %s3 = inlined_call_operand.vmem [shape: f32[8,1], index: 3, kind: input, shape index: {}]
  %s4 = inlined_call_operand.vmem [shape: f32[16,8], index: 4, kind: input, shape index: {}]
  %s5 = inlined_call_operand.vmem [shape: f32[16,8], index: 5, kind: input, shape index: {}]
  %s6 = inlined_call_operand.vmem [shape: f32[16,1], index: 6, kind: input, shape index: {}]
  %s7 = inlined_call_operand.vmem [shape: f32[16,16], index: 7, kind: input, shape index: {}]
  %s8 = inlined_call_operand.vmem [shape: f32[16,16], index: 8, kind: input, shape index: {}]
  %s9 = inlined_call_operand.vmem [shape: f32[16,1], index: 9, kind: input, shape index: {}]
  %s10 = inlined_call_operand.vmem [shape: f32[32,96], index: 10, kind: output, shape index: {}]
  %s11 = sld [smem:[#allocation0]]
  $region50: #{aittala_gcn1d_block.1} parent=0
    _
  %s13 = ssub.s32 1, %s11
  %s14 = scalar_select 0, %s13, %s11
  // Predicated region
  $region2: #{aittala_gcn1d_block.1} parent=0 // pred_check
    _
  $region3: #{aittala_gcn1d_block.1} parent=0 // pred_check_branch
    %16 = sbr.rel (0) target = $region5
  $region4: #{aittala_gcn1d_block.1} parent=0 // pred_region
    _
  $region5: #{aittala_gcn1d_block.1} parent=0 // pred_fallthru
    _
  // Predicated region
  $region6: #{aittala_gcn1d_block.1} parent=0 // pred_check
    _
  $region7: #{aittala_gcn1d_block.1} parent=0 // pred_check_branch
    %18 = sbr.rel (0) target = $region9
  $region8: #{aittala_gcn1d_block.1} parent=0 // pred_region
    _
  $region9: #{aittala_gcn1d_block.1} parent=0 // pred_fallthru
    _
  // Predicated region
  $region10: #{aittala_gcn1d_block.1} parent=0 // pred_check
    _
  $region11: #{aittala_gcn1d_block.1} parent=0 // pred_check_branch
    %20 = sbr.rel (0) target = $region13
  $region12: #{aittala_gcn1d_block.1} parent=0 // pred_region
    _
  $region13: #{aittala_gcn1d_block.1} parent=0 // pred_fallthru
    _
  // Predicated region
  $region14: #{aittala_gcn1d_block.1} parent=0 // pred_check
    _
  $region15: #{aittala_gcn1d_block.1} parent=0 // pred_check_branch
    %22 = sbr.rel (0) target = $region17
  $region16: #{aittala_gcn1d_block.1} parent=0 // pred_region
    _
  $region17: #{aittala_gcn1d_block.1} parent=0 // pred_fallthru
    _
  // Predicated region
  $region18: #{aittala_gcn1d_block.1} parent=0 // pred_check
    _
  $region19: #{aittala_gcn1d_block.1} parent=0 // pred_check_branch
    %24 = sbr.rel (0) target = $region21
  $region20: #{aittala_gcn1d_block.1} parent=0 // pred_region
    _
  $region21: #{aittala_gcn1d_block.1} parent=0 // pred_fallthru
    _
  // Predicated region
  $region22: #{aittala_gcn1d_block.1} parent=0 // pred_check
    _
  $region23: #{aittala_gcn1d_block.1} parent=0 // pred_check_branch
    %26 = sbr.rel (0) target = $region25
  $region24: #{aittala_gcn1d_block.1} parent=0 // pred_region
    _
  $region25: #{aittala_gcn1d_block.1} parent=0 // pred_fallthru
    _
  // Predicated region
  $region26: #{aittala_gcn1d_block.1} parent=0 // pred_check
    _
  $region27: #{aittala_gcn1d_block.1} parent=0 // pred_check_branch
    %28 = sbr.rel (0) target = $region29
  $region28: #{aittala_gcn1d_block.1} parent=0 // pred_region
    _
  $region29: #{aittala_gcn1d_block.1} parent=0 // pred_fallthru
    _
  // Predicated region
  $region30: #{aittala_gcn1d_block.1} parent=0 // pred_check
    _
  $region31: #{aittala_gcn1d_block.1} parent=0 // pred_check_branch
    %30 = sbr.rel (0) target = $region33
  $region32: #{aittala_gcn1d_block.1} parent=0 // pred_region
    _
  $region33: #{aittala_gcn1d_block.1} parent=0 // pred_fallthru
    _
  // Predicated region
  $region34: #{aittala_gcn1d_block.1} parent=0 // pred_check
    _
  $region35: #{aittala_gcn1d_block.1} parent=0 // pred_check_branch
    %32 = sbr.rel (0) target = $region37
  $region36: #{aittala_gcn1d_block.1} parent=0 // pred_region
    _
  $region37: #{aittala_gcn1d_block.1} parent=0 // pred_fallthru
    _
  // Predicated region
  $region38: #{aittala_gcn1d_block.1} parent=0 // pred_check
    _
  $region39: #{aittala_gcn1d_block.1} parent=0 // pred_check_branch
    %34 = sbr.rel (0) target = $region41
  $region40: #{aittala_gcn1d_block.1} parent=0 // pred_region
    _
  $region41: #{aittala_gcn1d_block.1} parent=0 // pred_fallthru
    _
  %v35 = vld [vmem:[%s1] sm:$0xff]
  %v36 = vld [vmem:[%s1 + $0x8] sm:$0xff]
  %v37 = vld [vmem:[%s1 + $0x10] sm:$0xff]
  %v38 = vld [vmem:[%s1 + $0x18] sm:$0xff]
  %v39 = vld [vmem:[%s1 + $0x20] sm:$0xff]
  %v40 = vld [vmem:[%s1 + $0x28] sm:$0xff]
  %v41 = vld [vmem:[%s1 + $0x30] sm:$0xff]
  %v42 = vld [vmem:[%s1 + $0x38] sm:$0xff]
  %v43 = vld [vmem:[%s1 + $0x40] sm:$0xff]
  %v44 = vld [vmem:[%s1 + $0x48] sm:$0xff]
  %v45 = vld [vmem:[%s1 + $0x50] sm:$0xff]
  %v46 = vld [vmem:[%s1 + $0x58] sm:$0xff]
  %v47 = vld [vmem:[%s2] sm:$0xff]
  %v48 = vld [vmem:[%s0] sm:$0xf]
  %vm49 = vcmask 31744
  %v51 = vsel %vm49, %v47, 0
  %vm53 = vcmask 1043456
  %v55 = vsel %vm53, %v48, 0
  %57 = vmatprep.subr.mxu0 0.0
  %58 = vmatpush1.msra.mxu0 %v55
  %59 = vmatprep.subr.mxu0 0.0
  %60 = vmatpush1.msra.mxu0 0.0
  %61 = vmatprep.subr.mxu0 0.0
  %62 = vmatpush1.msra.mxu0 0.0
  %63 = vmatprep.subr.mxu0 0.0
  %64 = vmatpush1.msra.mxu0 0.0
  %65 = vmatprep.subr.mxu0 0.0
  %66 = vmatpush1.msra.mxu0 0.0
  %67 = vmatprep.subr.mxu0 0.0
  %68 = vmatpush1.msra.mxu0 0.0
  %69 = vmatprep.subr.mxu0 0.0
  %70 = vmatpush1.msra.mxu0 0.0
  %71 = vmatprep.subr.mxu0 0.0
  %72 = vmatpush1.msra.mxu0 0.0
  %73 = vmatprep.subr.mxu0 0.0
  %74 = vmatpush1.msra.mxu0 0.0
  %75 = vmatprep.subr.mxu0 0.0
  %76 = vmatpush1.msra.mxu0 0.0
  %77 = vmatprep.subr.mxu0 0.0
  %78 = vmatpush1.msra.mxu0 0.0
  %79 = vmatprep.subr.mxu0 0.0
  %80 = vmatpush1.msra.mxu0 0.0
  %81 = vmatprep.subr.mxu0 0.0
  %82 = vmatpush1.msra.mxu0 0.0
  %83 = vmatprep.subr.mxu0 0.0
  %84 = vmatpush1.msra.mxu0 0.0
  %85 = vmatprep.subr.mxu0 0.0
  %86 = vmatpush1.msra.mxu0 0.0
  %87 = vmatprep.subr.mxu0 0.0
  %88 = vmatpush1.msra.mxu0 0.0
  %89 = vmatprep.subr.mxu0 0.0
  %90 = vmatpush1.msra.mxu0 0.0
  %91 = vmatprep.subr.mxu0 0.0
  %92 = vmatpush1.msra.mxu0 0.0
  %93 = vmatprep.subr.mxu0 0.0
  %94 = vmatpush1.msra.mxu0 0.0
  %95 = vmatprep.subr.mxu0 0.0
  %96 = vmatpush1.msra.mxu0 0.0
  %97 = vmatprep.subr.mxu0 0.0
  %98 = vmatpush1.msra.mxu0 0.0
  %99 = vmatprep.subr.mxu0 0.0
  %100 = vmatpush1.msra.mxu0 0.0
  %101 = vmatprep.subr.mxu0 0.0
  %102 = vmatpush1.msra.mxu0 0.0
  %103 = vmatprep.subr.mxu0 0.0
  %104 = vmatpush1.msra.mxu0 0.0
  %105 = vmatprep.subr.mxu0 0.0
  %106 = vmatpush1.msra.mxu0 0.0
  %107 = vmatprep.subr.mxu0 0.0
  %108 = vmatpush1.msra.mxu0 0.0
  %109 = vmatprep.subr.mxu0 0.0
  %110 = vmatpush1.msra.mxu0 0.0
  %111 = vmatprep.subr.mxu0 0.0
  %112 = vmatpush1.msra.mxu0 0.0
  %113 = vmatprep.subr.mxu0 0.0
  %114 = vmatpush1.msra.mxu0 0.0
  %115 = vmatprep.subr.mxu0 0.0
  %116 = vmatpush1.msra.mxu0 0.0
  %117 = vmatprep.subr.mxu0 0.0
  %118 = vmatpush1.msra.mxu0 0.0
  %119 = vmatprep.subr.mxu0 0.0
  %120 = vmatpush1.msra.mxu0 0.0
  %121 = vmatprep.mubr.f32.mxu0 0.0
  %122 = vmatmul.mubr.f32.gmra.mrb[0].mxu0 %v51
  %v123 = vpop.f32.mrb[0].mxu0
  %v124 = vadd.f32 0.0, %v123
  %v125 = vpop.f32.mrb[0].mxu0
  %126 = vdwg.mxu0
  %v127 = vld [vmem:[%s3] sm:$0xff]
  %129 = vset.pattern.permute.xlu0 0
  %130 = vperm.xlu0 %129, %v127
  %v131 = vpop.permute.xlu0 %130
  %vm133 = vcmask 785408
  %v135 = vsel %vm133, %v124, 0
  %137 = vmatprep.subr.mxu0 0.0
  %138 = vmatpush1.msra.mxu0 %v35
  %139 = vmatprep.subr.mxu0 0.0
  %140 = vmatpush1.msra.mxu0 %v36
  %141 = vmatprep.subr.mxu0 0.0
  %142 = vmatpush1.msra.mxu0 %v37
  %143 = vmatprep.subr.mxu0 0.0
  %144 = vmatpush1.msra.mxu0 %v38
  %145 = vmatprep.subr.mxu0 0.0
  %146 = vmatpush1.msra.mxu0 %v39
  %147 = vmatprep.subr.mxu0 0.0
  %148 = vmatpush1.msra.mxu0 %v40
  %149 = vmatprep.subr.mxu0 0.0
  %150 = vmatpush1.msra.mxu0 %v41
  %151 = vmatprep.subr.mxu0 0.0
  %152 = vmatpush1.msra.mxu0 %v42
  %153 = vmatprep.subr.mxu0 0.0
  %154 = vmatpush1.msra.mxu0 %v43
  %155 = vmatprep.subr.mxu0 0.0
  %156 = vmatpush1.msra.mxu0 %v44
  %157 = vmatprep.subr.mxu0 0.0
  %158 = vmatpush1.msra.mxu0 %v45
  %159 = vmatprep.subr.mxu0 0.0
  %160 = vmatpush1.msra.mxu0 %v46
  %161 = vmatprep.subr.mxu0 0.0
  %162 = vmatpush1.msra.mxu0 0.0
  %163 = vmatprep.subr.mxu0 0.0
  %164 = vmatpush1.msra.mxu0 0.0
  %165 = vmatprep.subr.mxu0 0.0
  %166 = vmatpush1.msra.mxu0 0.0
  %167 = vmatprep.subr.mxu0 0.0
  %168 = vmatpush1.msra.mxu0 0.0
  %169 = vmatprep.subr.mxu0 0.0
  %170 = vmatpush1.msra.mxu0 0.0
  %171 = vmatprep.subr.mxu0 0.0
  %172 = vmatpush1.msra.mxu0 0.0
  %173 = vmatprep.subr.mxu0 0.0
  %174 = vmatpush1.msra.mxu0 0.0
  %175 = vmatprep.subr.mxu0 0.0
  %176 = vmatpush1.msra.mxu0 0.0
  %177 = vmatprep.subr.mxu0 0.0
  %178 = vmatpush1.msra.mxu0 0.0
  %179 = vmatprep.subr.mxu0 0.0
  %180 = vmatpush1.msra.mxu0 0.0
  %181 = vmatprep.subr.mxu0 0.0
  %182 = vmatpush1.msra.mxu0 0.0
  %183 = vmatprep.subr.mxu0 0.0
  %184 = vmatpush1.msra.mxu0 0.0
  %185 = vmatprep.subr.mxu0 0.0
  %186 = vmatpush1.msra.mxu0 0.0
  %187 = vmatprep.subr.mxu0 0.0
  %188 = vmatpush1.msra.mxu0 0.0
  %189 = vmatprep.subr.mxu0 0.0
  %190 = vmatpush1.msra.mxu0 0.0
  %191 = vmatprep.subr.mxu0 0.0
  %192 = vmatpush1.msra.mxu0 0.0
  %193 = vmatprep.subr.mxu0 0.0
  %194 = vmatpush1.msra.mxu0 0.0
  %195 = vmatprep.subr.mxu0 0.0
  %196 = vmatpush1.msra.mxu0 0.0
  %197 = vmatprep.subr.mxu0 0.0
  %198 = vmatpush1.msra.mxu0 0.0
  %199 = vmatprep.subr.mxu0 0.0
  %200 = vmatpush1.msra.mxu0 0.0
  %201 = vmatprep.mubr.f32.mxu0 0.0
  %202 = vmatmul.mubr.f32.gmra.mrb[0].mxu0 %v135
  %v203 = vpop.f32.mrb[0].mxu0
  %v204 = vadd.f32 %v131, %v203
  %v205 = vpop.f32.mrb[0].mxu0
  %206 = vdwg.mxu0
  %v207 = vsel %vm133, %v204, 0.0
  %208 = vadd.xlane.f32.xlu0 %v207
  %v209 = vpop.xlane.xlu0 %208
  %v210 = vrcp.pop 96.0
  %v211 = vmul.f32 %v209, %v210
  %v212 = vsub.f32 %v204, %v211
  %v213 = vmul.f32 %v212, %v212
  %v214 = vsel %vm133, %v213, 0.0
  %215 = vadd.xlane.f32.xlu0 %v214
  %v216 = vpop.xlane.xlu0 %215
  %v217 = vmul.f32 %v216, %v210
  %v218 = vadd.f32 %v217, 1e-05
  %v219 = vrsqrt.pop %v218
  %v220 = vmul.f32 %v212, %v219
  %v221 = vmax.f32 %v220, 0.0
  %223 = vrot.lane.b32.xlu0 %v204, 96
  %v224 = vpop.permute.xlu0 %223
  %v226 = vmax.f32 %v204, %v224
  %227 = vrot.lane.b32.xlu0 %v204, 64
  %v228 = vpop.permute.xlu0 %227
  %v230 = vmax.f32 %v226, %v228
  %vm231 = vcmask 261120
  %v232 = vsel %vm231, %v230, 0.0
  %233 = vadd.xlane.f32.xlu0 %v232
  %v234 = vpop.xlane.xlu0 %233
  %v235 = vrcp.pop 32.0
  %v236 = vmul.f32 %v234, %v235
  %v237 = vsub.f32 %v230, %v236
  %v238 = vmul.f32 %v237, %v237
  %v239 = vsel %vm231, %v238, 0.0
  %240 = vadd.xlane.f32.xlu0 %v239
  %v241 = vpop.xlane.xlu0 %240
  %v242 = vmul.f32 %v241, %v235
  %v243 = vadd.f32 %v242, 1e-05
  %v244 = vrsqrt.pop %v243
  %v245 = vmul.f32 %v237, %v244
  %v246 = vmax.f32 %v245, 0.0
  %v247 = vld [vmem:[%s4] sm:$0xff]
  %v248 = vld [vmem:[%s4 + $0x8] sm:$0xff]
  %v249 = vld [vmem:[%s5] sm:$0xff]
  %v250 = vld [vmem:[%s5 + $0x8] sm:$0xff]
  %vm251 = vcmask 64512
  %v253 = vsel %vm251, %v249, 0
  %v256 = vsel %vm251, %v250, 0
  %258 = vmatprep.subr.mxu0 0.0
  %259 = vmatpush1.msra.mxu0 %v246
  %260 = vmatprep.subr.mxu0 0.0
  %261 = vmatpush1.msra.mxu0 0.0
  %262 = vmatprep.subr.mxu0 0.0
  %263 = vmatpush1.msra.mxu0 0.0
  %264 = vmatprep.subr.mxu0 0.0
  %265 = vmatpush1.msra.mxu0 0.0
  %266 = vmatprep.subr.mxu0 0.0
  %267 = vmatpush1.msra.mxu0 0.0
  %268 = vmatprep.subr.mxu0 0.0
  %269 = vmatpush1.msra.mxu0 0.0
  %270 = vmatprep.subr.mxu0 0.0
  %271 = vmatpush1.msra.mxu0 0.0
  %272 = vmatprep.subr.mxu0 0.0
  %273 = vmatpush1.msra.mxu0 0.0
  %274 = vmatprep.subr.mxu0 0.0
  %275 = vmatpush1.msra.mxu0 0.0
  %276 = vmatprep.subr.mxu0 0.0
  %277 = vmatpush1.msra.mxu0 0.0
  %278 = vmatprep.subr.mxu0 0.0
  %279 = vmatpush1.msra.mxu0 0.0
  %280 = vmatprep.subr.mxu0 0.0
  %281 = vmatpush1.msra.mxu0 0.0
  %282 = vmatprep.subr.mxu0 0.0
  %283 = vmatpush1.msra.mxu0 0.0
  %284 = vmatprep.subr.mxu0 0.0
  %285 = vmatpush1.msra.mxu0 0.0
  %286 = vmatprep.subr.mxu0 0.0
  %287 = vmatpush1.msra.mxu0 0.0
  %288 = vmatprep.subr.mxu0 0.0
  %289 = vmatpush1.msra.mxu0 0.0
  %290 = vmatprep.subr.mxu0 0.0
  %291 = vmatpush1.msra.mxu0 0.0
  %292 = vmatprep.subr.mxu0 0.0
  %293 = vmatpush1.msra.mxu0 0.0
  %294 = vmatprep.subr.mxu0 0.0
  %295 = vmatpush1.msra.mxu0 0.0
  %296 = vmatprep.subr.mxu0 0.0
  %297 = vmatpush1.msra.mxu0 0.0
  %298 = vmatprep.subr.mxu0 0.0
  %299 = vmatpush1.msra.mxu0 0.0
  %300 = vmatprep.subr.mxu0 0.0
  %301 = vmatpush1.msra.mxu0 0.0
  %302 = vmatprep.subr.mxu0 0.0
  %303 = vmatpush1.msra.mxu0 0.0
  %304 = vmatprep.subr.mxu0 0.0
  %305 = vmatpush1.msra.mxu0 0.0
  %306 = vmatprep.subr.mxu0 0.0
  %307 = vmatpush1.msra.mxu0 0.0
  %308 = vmatprep.subr.mxu0 0.0
  %309 = vmatpush1.msra.mxu0 0.0
  %310 = vmatprep.subr.mxu0 0.0
  %311 = vmatpush1.msra.mxu0 0.0
  %312 = vmatprep.subr.mxu0 0.0
  %313 = vmatpush1.msra.mxu0 0.0
  %314 = vmatprep.subr.mxu0 0.0
  %315 = vmatpush1.msra.mxu0 0.0
  %316 = vmatprep.subr.mxu0 0.0
  %317 = vmatpush1.msra.mxu0 0.0
  %318 = vmatprep.subr.mxu0 0.0
  %319 = vmatpush1.msra.mxu0 0.0
  %320 = vmatprep.subr.mxu0 0.0
  %321 = vmatpush1.msra.mxu0 0.0
  %322 = vmatprep.mubr.f32.mxu0 0.0
  %323 = vmatmul.mubr.f32.gmra.mrb[0].mxu0 %v253
  %v324 = vpop.f32.mrb[0].mxu0
  %v325 = vadd.f32 0.0, %v324
  %v326 = vpop.f32.mrb[0].mxu0
  %327 = vmatprep.mubr.f32.mxu0 0.0
  %328 = vmatmul.mubr.f32.gmra.mrb[0].mxu0 %v256
  %v329 = vpop.f32.mrb[0].mxu0
  %v330 = vadd.f32 0.0, %v329
  %v331 = vpop.f32.mrb[0].mxu0
  %332 = vdwg.mxu0
  %335 = vrot.lane.b32.xlu0 %v325, 32
  %v336 = vpop.permute.xlu0 %335
  %337 = vrot.lane.b32.xlu0 %v330, 32
  %v338 = vpop.permute.xlu0 %337
  %341 = vrot.lane.b32.xlu0 %v325, 64
  %v342 = vpop.permute.xlu0 %341
  %343 = vrot.lane.b32.xlu0 %v330, 64
  %v344 = vpop.permute.xlu0 %343
  %v347 = vsel %vm231, %v325, %v336
  %v348 = vsel %vm231, %v330, %v338
  %vm349 = vcmask 523264
  %v350 = vsel %vm349, %v347, %v342
  %v351 = vsel %vm349, %v348, %v344
  %v353 = vsel %vm251, %v247, 0
  %v356 = vsel %vm251, %v248, 0
  %358 = vmatprep.subr.mxu0 0.0
  %359 = vmatpush1.msra.mxu0 %v221
  %360 = vmatprep.subr.mxu0 0.0
  %361 = vmatpush1.msra.mxu0 0.0
  %362 = vmatprep.subr.mxu0 0.0
  %363 = vmatpush1.msra.mxu0 0.0
  %364 = vmatprep.subr.mxu0 0.0
  %365 = vmatpush1.msra.mxu0 0.0
  %366 = vmatprep.subr.mxu0 0.0
  %367 = vmatpush1.msra.mxu0 0.0
  %368 = vmatprep.subr.mxu0 0.0
  %369 = vmatpush1.msra.mxu0 0.0
  %370 = vmatprep.subr.mxu0 0.0
  %371 = vmatpush1.msra.mxu0 0.0
  %372 = vmatprep.subr.mxu0 0.0
  %373 = vmatpush1.msra.mxu0 0.0
  %374 = vmatprep.subr.mxu0 0.0
  %375 = vmatpush1.msra.mxu0 0.0
  %376 = vmatprep.subr.mxu0 0.0
  %377 = vmatpush1.msra.mxu0 0.0
  %378 = vmatprep.subr.mxu0 0.0
  %379 = vmatpush1.msra.mxu0 0.0
  %380 = vmatprep.subr.mxu0 0.0
  %381 = vmatpush1.msra.mxu0 0.0
  %382 = vmatprep.subr.mxu0 0.0
  %383 = vmatpush1.msra.mxu0 0.0
  %384 = vmatprep.subr.mxu0 0.0
  %385 = vmatpush1.msra.mxu0 0.0
  %386 = vmatprep.subr.mxu0 0.0
  %387 = vmatpush1.msra.mxu0 0.0
  %388 = vmatprep.subr.mxu0 0.0
  %389 = vmatpush1.msra.mxu0 0.0
  %390 = vmatprep.subr.mxu0 0.0
  %391 = vmatpush1.msra.mxu0 0.0
  %392 = vmatprep.subr.mxu0 0.0
  %393 = vmatpush1.msra.mxu0 0.0
  %394 = vmatprep.subr.mxu0 0.0
  %395 = vmatpush1.msra.mxu0 0.0
  %396 = vmatprep.subr.mxu0 0.0
  %397 = vmatpush1.msra.mxu0 0.0
  %398 = vmatprep.subr.mxu0 0.0
  %399 = vmatpush1.msra.mxu0 0.0
  %400 = vmatprep.subr.mxu0 0.0
  %401 = vmatpush1.msra.mxu0 0.0
  %402 = vmatprep.subr.mxu0 0.0
  %403 = vmatpush1.msra.mxu0 0.0
  %404 = vmatprep.subr.mxu0 0.0
  %405 = vmatpush1.msra.mxu0 0.0
  %406 = vmatprep.subr.mxu0 0.0
  %407 = vmatpush1.msra.mxu0 0.0
  %408 = vmatprep.subr.mxu0 0.0
  %409 = vmatpush1.msra.mxu0 0.0
  %410 = vmatprep.subr.mxu0 0.0
  %411 = vmatpush1.msra.mxu0 0.0
  %412 = vmatprep.subr.mxu0 0.0
  %413 = vmatpush1.msra.mxu0 0.0
  %414 = vmatprep.subr.mxu0 0.0
  %415 = vmatpush1.msra.mxu0 0.0
  %416 = vmatprep.subr.mxu0 0.0
  %417 = vmatpush1.msra.mxu0 0.0
  %418 = vmatprep.subr.mxu0 0.0
  %419 = vmatpush1.msra.mxu0 0.0
  %420 = vmatprep.subr.mxu0 0.0
  %421 = vmatpush1.msra.mxu0 0.0
  %422 = vmatprep.mubr.f32.mxu0 0.0
  %423 = vmatmul.mubr.f32.gmra.mrb[0].mxu0 %v353
  %v424 = vpop.f32.mrb[0].mxu0
  %v425 = vadd.f32 %v350, %v424
  %v426 = vpop.f32.mrb[0].mxu0
  %427 = vmatprep.mubr.f32.mxu0 0.0
  %428 = vmatmul.mubr.f32.gmra.mrb[0].mxu0 %v356
  %v429 = vpop.f32.mrb[0].mxu0
  %v430 = vadd.f32 %v351, %v429
  %v431 = vpop.f32.mrb[0].mxu0
  %432 = vdwg.mxu0
  %v433 = vld [vmem:[%s6] sm:$0xff]
  %v434 = vld [vmem:[%s6 + $0x8] sm:$0xff]
  %436 = vset.pattern.permute.xlu0 0
  %437 = vperm.xlu0 %436, %v433
  %v438 = vpop.permute.xlu0 %437
  %441 = vset.pattern.permute.xlu0 0
  %442 = vperm.xlu0 %441, %v434
  %v443 = vpop.permute.xlu0 %442
  %v446 = vsel %vm133, %v425, 0
  %v449 = vsel %vm133, %v430, 0
  %451 = vmatprep.subr.mxu0 0.0
  %452 = vmatpush1.msra.mxu0 %v35
  %453 = vmatprep.subr.mxu0 0.0
  %454 = vmatpush1.msra.mxu0 %v36
  %455 = vmatprep.subr.mxu0 0.0
  %456 = vmatpush1.msra.mxu0 %v37
  %457 = vmatprep.subr.mxu0 0.0
  %458 = vmatpush1.msra.mxu0 %v38
  %459 = vmatprep.subr.mxu0 0.0
  %460 = vmatpush1.msra.mxu0 %v39
  %461 = vmatprep.subr.mxu0 0.0
  %462 = vmatpush1.msra.mxu0 %v40
  %463 = vmatprep.subr.mxu0 0.0
  %464 = vmatpush1.msra.mxu0 %v41
  %465 = vmatprep.subr.mxu0 0.0
  %466 = vmatpush1.msra.mxu0 %v42
  %467 = vmatprep.subr.mxu0 0.0
  %468 = vmatpush1.msra.mxu0 %v43
  %469 = vmatprep.subr.mxu0 0.0
  %470 = vmatpush1.msra.mxu0 %v44
  %471 = vmatprep.subr.mxu0 0.0
  %472 = vmatpush1.msra.mxu0 %v45
  %473 = vmatprep.subr.mxu0 0.0
  %474 = vmatpush1.msra.mxu0 %v46
  %475 = vmatprep.subr.mxu0 0.0
  %476 = vmatpush1.msra.mxu0 0.0
  %477 = vmatprep.subr.mxu0 0.0
  %478 = vmatpush1.msra.mxu0 0.0
  %479 = vmatprep.subr.mxu0 0.0
  %480 = vmatpush1.msra.mxu0 0.0
  %481 = vmatprep.subr.mxu0 0.0
  %482 = vmatpush1.msra.mxu0 0.0
  %483 = vmatprep.subr.mxu0 0.0
  %484 = vmatpush1.msra.mxu0 0.0
  %485 = vmatprep.subr.mxu0 0.0
  %486 = vmatpush1.msra.mxu0 0.0
  %487 = vmatprep.subr.mxu0 0.0
  %488 = vmatpush1.msra.mxu0 0.0
  %489 = vmatprep.subr.mxu0 0.0
  %490 = vmatpush1.msra.mxu0 0.0
  %491 = vmatprep.subr.mxu0 0.0
  %492 = vmatpush1.msra.mxu0 0.0
  %493 = vmatprep.subr.mxu0 0.0
  %494 = vmatpush1.msra.mxu0 0.0
  %495 = vmatprep.subr.mxu0 0.0
  %496 = vmatpush1.msra.mxu0 0.0
  %497 = vmatprep.subr.mxu0 0.0
  %498 = vmatpush1.msra.mxu0 0.0
  %499 = vmatprep.subr.mxu0 0.0
  %500 = vmatpush1.msra.mxu0 0.0
  %501 = vmatprep.subr.mxu0 0.0
  %502 = vmatpush1.msra.mxu0 0.0
  %503 = vmatprep.subr.mxu0 0.0
  %504 = vmatpush1.msra.mxu0 0.0
  %505 = vmatprep.subr.mxu0 0.0
  %506 = vmatpush1.msra.mxu0 0.0
  %507 = vmatprep.subr.mxu0 0.0
  %508 = vmatpush1.msra.mxu0 0.0
  %509 = vmatprep.subr.mxu0 0.0
  %510 = vmatpush1.msra.mxu0 0.0
  %511 = vmatprep.subr.mxu0 0.0
  %512 = vmatpush1.msra.mxu0 0.0
  %513 = vmatprep.subr.mxu0 0.0
  %514 = vmatpush1.msra.mxu0 0.0
  %515 = vmatprep.mubr.f32.mxu0 0.0
  %516 = vmatmul.mubr.f32.gmra.mrb[0].mxu0 %v446
  %v517 = vpop.f32.mrb[0].mxu0
  %v518 = vadd.f32 %v438, %v517
  %v519 = vpop.f32.mrb[0].mxu0
  %520 = vmatprep.mubr.f32.mxu0 0.0
  %521 = vmatmul.mubr.f32.gmra.mrb[0].mxu0 %v449
  %v522 = vpop.f32.mrb[0].mxu0
  %v523 = vadd.f32 %v443, %v522
  %v524 = vpop.f32.mrb[0].mxu0
  %525 = vdwg.mxu0
  %v526 = vsel %vm133, %v518, 0.0
  %527 = vadd.xlane.f32.xlu0 %v526
  %v528 = vpop.xlane.xlu0 %527
  %v529 = vsel %vm133, %v523, 0.0
  %530 = vadd.xlane.f32.xlu0 %v529
  %v531 = vpop.xlane.xlu0 %530
  %v532 = vmul.f32 %v528, %v210
  %v533 = vmul.f32 %v531, %v210
  %v534 = vsub.f32 %v518, %v532
  %v535 = vsub.f32 %v523, %v533
  %v536 = vmul.f32 %v534, %v534
  %v537 = vmul.f32 %v535, %v535
  %v538 = vsel %vm133, %v536, 0.0
  %539 = vadd.xlane.f32.xlu0 %v538
  %v540 = vpop.xlane.xlu0 %539
  %v541 = vsel %vm133, %v537, 0.0
  %542 = vadd.xlane.f32.xlu0 %v541
  %v543 = vpop.xlane.xlu0 %542
  %v544 = vmul.f32 %v540, %v210
  %v545 = vmul.f32 %v543, %v210
  %v546 = vadd.f32 %v544, 1e-05
  %v547 = vadd.f32 %v545, 1e-05
  %v548 = vrsqrt.pop %v546
  %v549 = vrsqrt.pop %v547
  %v550 = vmul.f32 %v534, %v548
  %v551 = vmul.f32 %v535, %v549
  %v552 = vmax.f32 %v550, 0.0
  %v553 = vmax.f32 %v551, 0.0
  %556 = vrot.lane.b32.xlu0 %v518, 96
  %v557 = vpop.permute.xlu0 %556
  %558 = vrot.lane.b32.xlu0 %v523, 96
  %v559 = vpop.permute.xlu0 %558
  %v562 = vmax.f32 %v518, %v557
  %v563 = vmax.f32 %v523, %v559
  %564 = vrot.lane.b32.xlu0 %v518, 64
  %v565 = vpop.permute.xlu0 %564
  %566 = vrot.lane.b32.xlu0 %v523, 64
  %v567 = vpop.permute.xlu0 %566
  %v570 = vmax.f32 %v562, %v565
  %v571 = vmax.f32 %v563, %v567
  %v572 = vsel %vm231, %v570, 0.0
  %573 = vadd.xlane.f32.xlu0 %v572
  %v574 = vpop.xlane.xlu0 %573
  %v575 = vsel %vm231, %v571, 0.0
  %576 = vadd.xlane.f32.xlu0 %v575
  %v577 = vpop.xlane.xlu0 %576
  %v578 = vmul.f32 %v574, %v235
  %v579 = vmul.f32 %v577, %v235
  %v580 = vsub.f32 %v570, %v578
  %v581 = vsub.f32 %v571, %v579
  %v582 = vmul.f32 %v580, %v580
  %v583 = vmul.f32 %v581, %v581
  %v584 = vsel %vm231, %v582, 0.0
  %585 = vadd.xlane.f32.xlu0 %v584
  %v586 = vpop.xlane.xlu0 %585
  %v587 = vsel %vm231, %v583, 0.0
  %588 = vadd.xlane.f32.xlu0 %v587
  %v589 = vpop.xlane.xlu0 %588
  %v590 = vmul.f32 %v586, %v235
  %v591 = vmul.f32 %v589, %v235
  %v592 = vadd.f32 %v590, 1e-05
  %v593 = vadd.f32 %v591, 1e-05
  %v594 = vrsqrt.pop %v592
  %v595 = vrsqrt.pop %v593
  %v596 = vmul.f32 %v580, %v594
  %v597 = vmul.f32 %v581, %v595
  %v598 = vmax.f32 %v596, 0.0
  %v599 = vmax.f32 %v597, 0.0
  %v600 = vld [vmem:[%s7] sm:$0xff]
  %v601 = vld [vmem:[%s7 + $0x8] sm:$0xff]
  %v602 = vld [vmem:[%s8] sm:$0xff]
  %v603 = vld [vmem:[%s8 + $0x8] sm:$0xff]
  %vm604 = vcmask 130048
  %v606 = vsel %vm604, %v602, 0
  %v609 = vsel %vm604, %v603, 0
  %611 = vmatprep.subr.mxu0 0.0
  %612 = vmatpush1.msra.mxu0 %v598
  %613 = vmatprep.subr.mxu0 0.0
  %614 = vmatpush1.msra.mxu0 %v599
  %615 = vmatprep.subr.mxu0 0.0
  %616 = vmatpush1.msra.mxu0 0.0
  %617 = vmatprep.subr.mxu0 0.0
  %618 = vmatpush1.msra.mxu0 0.0
  %619 = vmatprep.subr.mxu0 0.0
  %620 = vmatpush1.msra.mxu0 0.0
  %621 = vmatprep.subr.mxu0 0.0
  %622 = vmatpush1.msra.mxu0 0.0
  %623 = vmatprep.subr.mxu0 0.0
  %624 = vmatpush1.msra.mxu0 0.0
  %625 = vmatprep.subr.mxu0 0.0
  %626 = vmatpush1.msra.mxu0 0.0
  %627 = vmatprep.subr.mxu0 0.0
  %628 = vmatpush1.msra.mxu0 0.0
  %629 = vmatprep.subr.mxu0 0.0
  %630 = vmatpush1.msra.mxu0 0.0
  %631 = vmatprep.subr.mxu0 0.0
  %632 = vmatpush1.msra.mxu0 0.0
  %633 = vmatprep.subr.mxu0 0.0
  %634 = vmatpush1.msra.mxu0 0.0
  %635 = vmatprep.subr.mxu0 0.0
  %636 = vmatpush1.msra.mxu0 0.0
  %637 = vmatprep.subr.mxu0 0.0
  %638 = vmatpush1.msra.mxu0 0.0
  %639 = vmatprep.subr.mxu0 0.0
  %640 = vmatpush1.msra.mxu0 0.0
  %641 = vmatprep.subr.mxu0 0.0
  %642 = vmatpush1.msra.mxu0 0.0
  %643 = vmatprep.subr.mxu0 0.0
  %644 = vmatpush1.msra.mxu0 0.0
  %645 = vmatprep.subr.mxu0 0.0
  %646 = vmatpush1.msra.mxu0 0.0
  %647 = vmatprep.subr.mxu0 0.0
  %648 = vmatpush1.msra.mxu0 0.0
  %649 = vmatprep.subr.mxu0 0.0
  %650 = vmatpush1.msra.mxu0 0.0
  %651 = vmatprep.subr.mxu0 0.0
  %652 = vmatpush1.msra.mxu0 0.0
  %653 = vmatprep.subr.mxu0 0.0
  %654 = vmatpush1.msra.mxu0 0.0
  %655 = vmatprep.subr.mxu0 0.0
  %656 = vmatpush1.msra.mxu0 0.0
  %657 = vmatprep.subr.mxu0 0.0
  %658 = vmatpush1.msra.mxu0 0.0
  %659 = vmatprep.subr.mxu0 0.0
  %660 = vmatpush1.msra.mxu0 0.0
  %661 = vmatprep.subr.mxu0 0.0
  %662 = vmatpush1.msra.mxu0 0.0
  %663 = vmatprep.subr.mxu0 0.0
  %664 = vmatpush1.msra.mxu0 0.0
  %665 = vmatprep.subr.mxu0 0.0
  %666 = vmatpush1.msra.mxu0 0.0
  %667 = vmatprep.subr.mxu0 0.0
  %668 = vmatpush1.msra.mxu0 0.0
  %669 = vmatprep.subr.mxu0 0.0
  %670 = vmatpush1.msra.mxu0 0.0
  %671 = vmatprep.subr.mxu0 0.0
  %672 = vmatpush1.msra.mxu0 0.0
  %673 = vmatprep.subr.mxu0 0.0
  %674 = vmatpush1.msra.mxu0 0.0
  %675 = vmatprep.mubr.f32.mxu0 0.0
  %676 = vmatmul.mubr.f32.gmra.mrb[0].mxu0 %v606
  %v677 = vpop.f32.mrb[0].mxu0
  %v678 = vadd.f32 0.0, %v677
  %v679 = vpop.f32.mrb[0].mxu0
  %680 = vmatprep.mubr.f32.mxu0 0.0
  %681 = vmatmul.mubr.f32.gmra.mrb[0].mxu0 %v609
  %v682 = vpop.f32.mrb[0].mxu0
  %v683 = vadd.f32 0.0, %v682
  %v684 = vpop.f32.mrb[0].mxu0
  %685 = vdwg.mxu0
  %688 = vrot.lane.b32.xlu0 %v678, 32
  %v689 = vpop.permute.xlu0 %688
  %690 = vrot.lane.b32.xlu0 %v683, 32
  %v691 = vpop.permute.xlu0 %690
  %694 = vrot.lane.b32.xlu0 %v678, 64
  %v695 = vpop.permute.xlu0 %694
  %696 = vrot.lane.b32.xlu0 %v683, 64
  %v697 = vpop.permute.xlu0 %696
  %v700 = vsel %vm231, %v678, %v689
  %v701 = vsel %vm231, %v683, %v691
  %v702 = vsel %vm349, %v700, %v695
  %v703 = vsel %vm349, %v701, %v697
  %v705 = vsel %vm604, %v600, 0
  %v708 = vsel %vm604, %v601, 0
  %710 = vmatprep.subr.mxu0 0.0
  %711 = vmatpush1.msra.mxu0 %v552
  %712 = vmatprep.subr.mxu0 0.0
  %713 = vmatpush1.msra.mxu0 %v553
  %714 = vmatprep.subr.mxu0 0.0
  %715 = vmatpush1.msra.mxu0 0.0
  %716 = vmatprep.subr.mxu0 0.0
  %717 = vmatpush1.msra.mxu0 0.0
  %718 = vmatprep.subr.mxu0 0.0
  %719 = vmatpush1.msra.mxu0 0.0
  %720 = vmatprep.subr.mxu0 0.0
  %721 = vmatpush1.msra.mxu0 0.0
  %722 = vmatprep.subr.mxu0 0.0
  %723 = vmatpush1.msra.mxu0 0.0
  %724 = vmatprep.subr.mxu0 0.0
  %725 = vmatpush1.msra.mxu0 0.0
  %726 = vmatprep.subr.mxu0 0.0
  %727 = vmatpush1.msra.mxu0 0.0
  %728 = vmatprep.subr.mxu0 0.0
  %729 = vmatpush1.msra.mxu0 0.0
  %730 = vmatprep.subr.mxu0 0.0
  %731 = vmatpush1.msra.mxu0 0.0
  %732 = vmatprep.subr.mxu0 0.0
  %733 = vmatpush1.msra.mxu0 0.0
  %734 = vmatprep.subr.mxu0 0.0
  %735 = vmatpush1.msra.mxu0 0.0
  %736 = vmatprep.subr.mxu0 0.0
  %737 = vmatpush1.msra.mxu0 0.0
  %738 = vmatprep.subr.mxu0 0.0
  %739 = vmatpush1.msra.mxu0 0.0
  %740 = vmatprep.subr.mxu0 0.0
  %741 = vmatpush1.msra.mxu0 0.0
  %742 = vmatprep.subr.mxu0 0.0
  %743 = vmatpush1.msra.mxu0 0.0
  %744 = vmatprep.subr.mxu0 0.0
  %745 = vmatpush1.msra.mxu0 0.0
  %746 = vmatprep.subr.mxu0 0.0
  %747 = vmatpush1.msra.mxu0 0.0
  %748 = vmatprep.subr.mxu0 0.0
  %749 = vmatpush1.msra.mxu0 0.0
  %750 = vmatprep.subr.mxu0 0.0
  %751 = vmatpush1.msra.mxu0 0.0
  %752 = vmatprep.subr.mxu0 0.0
  %753 = vmatpush1.msra.mxu0 0.0
  %754 = vmatprep.subr.mxu0 0.0
  %755 = vmatpush1.msra.mxu0 0.0
  %756 = vmatprep.subr.mxu0 0.0
  %757 = vmatpush1.msra.mxu0 0.0
  %758 = vmatprep.subr.mxu0 0.0
  %759 = vmatpush1.msra.mxu0 0.0
  %760 = vmatprep.subr.mxu0 0.0
  %761 = vmatpush1.msra.mxu0 0.0
  %762 = vmatprep.subr.mxu0 0.0
  %763 = vmatpush1.msra.mxu0 0.0
  %764 = vmatprep.subr.mxu0 0.0
  %765 = vmatpush1.msra.mxu0 0.0
  %766 = vmatprep.subr.mxu0 0.0
  %767 = vmatpush1.msra.mxu0 0.0
  %768 = vmatprep.subr.mxu0 0.0
  %769 = vmatpush1.msra.mxu0 0.0
  %770 = vmatprep.subr.mxu0 0.0
  %771 = vmatpush1.msra.mxu0 0.0
  %772 = vmatprep.subr.mxu0 0.0
  %773 = vmatpush1.msra.mxu0 0.0
  %774 = vmatprep.mubr.f32.mxu0 0.0
  %775 = vmatmul.mubr.f32.gmra.mrb[0].mxu0 %v705
  %v776 = vpop.f32.mrb[0].mxu0
  %v777 = vadd.f32 %v702, %v776
  %v778 = vpop.f32.mrb[0].mxu0
  %779 = vmatprep.mubr.f32.mxu0 0.0
  %780 = vmatmul.mubr.f32.gmra.mrb[0].mxu0 %v708
  %v781 = vpop.f32.mrb[0].mxu0
  %v782 = vadd.f32 %v703, %v781
  %v783 = vpop.f32.mrb[0].mxu0
  %784 = vdwg.mxu0
  %v785 = vld [vmem:[%s9] sm:$0xff]
  %v786 = vld [vmem:[%s9 + $0x8] sm:$0xff]
  %788 = vset.pattern.permute.xlu0 0
  %789 = vperm.xlu0 %788, %v785
  %v790 = vpop.permute.xlu0 %789
  %793 = vset.pattern.permute.xlu0 0
  %794 = vperm.xlu0 %793, %v786
  %v795 = vpop.permute.xlu0 %794
  %v798 = vsel %vm133, %v777, 0
  %v801 = vsel %vm133, %v782, 0
  %803 = vmatprep.subr.mxu0 0.0
  %804 = vmatpush1.msra.mxu0 %v35
  %805 = vmatprep.subr.mxu0 0.0
  %806 = vmatpush1.msra.mxu0 %v36
  %807 = vmatprep.subr.mxu0 0.0
  %808 = vmatpush1.msra.mxu0 %v37
  %809 = vmatprep.subr.mxu0 0.0
  %810 = vmatpush1.msra.mxu0 %v38
  %811 = vmatprep.subr.mxu0 0.0
  %812 = vmatpush1.msra.mxu0 %v39
  %813 = vmatprep.subr.mxu0 0.0
  %814 = vmatpush1.msra.mxu0 %v40
  %815 = vmatprep.subr.mxu0 0.0
  %816 = vmatpush1.msra.mxu0 %v41
  %817 = vmatprep.subr.mxu0 0.0
  %818 = vmatpush1.msra.mxu0 %v42
  %819 = vmatprep.subr.mxu0 0.0
  %820 = vmatpush1.msra.mxu0 %v43
  %821 = vmatprep.subr.mxu0 0.0
  %822 = vmatpush1.msra.mxu0 %v44
  %823 = vmatprep.subr.mxu0 0.0
  %824 = vmatpush1.msra.mxu0 %v45
  %825 = vmatprep.subr.mxu0 0.0
  %826 = vmatpush1.msra.mxu0 %v46
  %827 = vmatprep.subr.mxu0 0.0
  %828 = vmatpush1.msra.mxu0 0.0
  %829 = vmatprep.subr.mxu0 0.0
  %830 = vmatpush1.msra.mxu0 0.0
  %831 = vmatprep.subr.mxu0 0.0
  %832 = vmatpush1.msra.mxu0 0.0
  %833 = vmatprep.subr.mxu0 0.0
  %834 = vmatpush1.msra.mxu0 0.0
  %835 = vmatprep.subr.mxu0 0.0
  %836 = vmatpush1.msra.mxu0 0.0
  %837 = vmatprep.subr.mxu0 0.0
  %838 = vmatpush1.msra.mxu0 0.0
  %839 = vmatprep.subr.mxu0 0.0
  %840 = vmatpush1.msra.mxu0 0.0
  %841 = vmatprep.subr.mxu0 0.0
  %842 = vmatpush1.msra.mxu0 0.0
  %843 = vmatprep.subr.mxu0 0.0
  %844 = vmatpush1.msra.mxu0 0.0
  %845 = vmatprep.subr.mxu0 0.0
  %846 = vmatpush1.msra.mxu0 0.0
  %847 = vmatprep.subr.mxu0 0.0
  %848 = vmatpush1.msra.mxu0 0.0
  %849 = vmatprep.subr.mxu0 0.0
  %850 = vmatpush1.msra.mxu0 0.0
  %851 = vmatprep.subr.mxu0 0.0
  %852 = vmatpush1.msra.mxu0 0.0
  %853 = vmatprep.subr.mxu0 0.0
  %854 = vmatpush1.msra.mxu0 0.0
  %855 = vmatprep.subr.mxu0 0.0
  %856 = vmatpush1.msra.mxu0 0.0
  %857 = vmatprep.subr.mxu0 0.0
  %858 = vmatpush1.msra.mxu0 0.0
  %859 = vmatprep.subr.mxu0 0.0
  %860 = vmatpush1.msra.mxu0 0.0
  %861 = vmatprep.subr.mxu0 0.0
  %862 = vmatpush1.msra.mxu0 0.0
  %863 = vmatprep.subr.mxu0 0.0
  %864 = vmatpush1.msra.mxu0 0.0
  %865 = vmatprep.subr.mxu0 0.0
  %866 = vmatpush1.msra.mxu0 0.0
  %867 = vmatprep.mubr.f32.mxu0 0.0
  %868 = vmatmul.mubr.f32.gmra.mrb[0].mxu0 %v798
  %v869 = vpop.f32.mrb[0].mxu0
  %v870 = vadd.f32 %v790, %v869
  %v871 = vpop.f32.mrb[0].mxu0
  %872 = vmatprep.mubr.f32.mxu0 0.0
  %873 = vmatmul.mubr.f32.gmra.mrb[0].mxu0 %v801
  %v874 = vpop.f32.mrb[0].mxu0
  %v875 = vadd.f32 %v795, %v874
  %v876 = vpop.f32.mrb[0].mxu0
  %877 = vdwg.mxu0
  %v878 = vsel %vm133, %v870, 0.0
  %879 = vadd.xlane.f32.xlu0 %v878
  %v880 = vpop.xlane.xlu0 %879
  %v881 = vsel %vm133, %v875, 0.0
  %882 = vadd.xlane.f32.xlu0 %v881
  %v883 = vpop.xlane.xlu0 %882
  %v884 = vmul.f32 %v880, %v210
  %v885 = vmul.f32 %v883, %v210
  %v886 = vsub.f32 %v870, %v884
  %v887 = vsub.f32 %v875, %v885
  %v888 = vmul.f32 %v886, %v886
  %v889 = vmul.f32 %v887, %v887
  %v890 = vsel %vm133, %v888, 0.0
  %891 = vadd.xlane.f32.xlu0 %v890
  %v892 = vpop.xlane.xlu0 %891
  %v893 = vsel %vm133, %v889, 0.0
  %894 = vadd.xlane.f32.xlu0 %v893
  %v895 = vpop.xlane.xlu0 %894
  %v896 = vmul.f32 %v892, %v210
  %v897 = vmul.f32 %v895, %v210
  %v898 = vadd.f32 %v896, 1e-05
  %v899 = vadd.f32 %v897, 1e-05
  %v900 = vrsqrt.pop %v898
  %v901 = vrsqrt.pop %v899
  %v902 = vmul.f32 %v886, %v900
  %v903 = vmul.f32 %v887, %v901
  %v904 = vmax.f32 %v902, 0.0
  %v905 = vmax.f32 %v903, 0.0
  %908 = vrot.lane.b32.xlu0 %v870, 96
  %v909 = vpop.permute.xlu0 %908
  %910 = vrot.lane.b32.xlu0 %v875, 96
  %v911 = vpop.permute.xlu0 %910
  %v914 = vmax.f32 %v870, %v909
  %v915 = vmax.f32 %v875, %v911
  %916 = vrot.lane.b32.xlu0 %v870, 64
  %v917 = vpop.permute.xlu0 %916
  %918 = vrot.lane.b32.xlu0 %v875, 64
  %v919 = vpop.permute.xlu0 %918
  %v922 = vmax.f32 %v914, %v917
  %v923 = vmax.f32 %v915, %v919
  %v924 = vsel %vm231, %v922, 0.0
  %925 = vadd.xlane.f32.xlu0 %v924
  %v926 = vpop.xlane.xlu0 %925
  %v927 = vsel %vm231, %v923, 0.0
  %928 = vadd.xlane.f32.xlu0 %v927
  %v929 = vpop.xlane.xlu0 %928
  %v930 = vmul.f32 %v926, %v235
  %v931 = vmul.f32 %v929, %v235
  %v932 = vsub.f32 %v922, %v930
  %v933 = vsub.f32 %v923, %v931
  %v934 = vmul.f32 %v932, %v932
  %v935 = vmul.f32 %v933, %v933
  %v936 = vsel %vm231, %v934, 0.0
  %937 = vadd.xlane.f32.xlu0 %v936
  %v938 = vpop.xlane.xlu0 %937
  %v939 = vsel %vm231, %v935, 0.0
  %940 = vadd.xlane.f32.xlu0 %v939
  %v941 = vpop.xlane.xlu0 %940
  %v942 = vmul.f32 %v938, %v235
  %v943 = vmul.f32 %v941, %v235
  %v944 = vadd.f32 %v942, 1e-05
  %v945 = vadd.f32 %v943, 1e-05
  %v946 = vrsqrt.pop %v944
  %v947 = vrsqrt.pop %v945
  %v948 = vmul.f32 %v932, %v946
  %v949 = vmul.f32 %v933, %v947
  %v950 = vmax.f32 %v948, 0.0
  %v951 = vmax.f32 %v949, 0.0
  %952 = vst.msk [vmem:[%s10] sm:$0xff] %vm133, %v904
  %953 = vst.msk [vmem:[%s10 + $0x8] sm:$0xff] %vm133, %v905
  %956 = vrot.lane.b32.xlu0 %v950, 32
  %v957 = vpop.permute.xlu0 %956
  %958 = vrot.lane.b32.xlu0 %v951, 32
  %v959 = vpop.permute.xlu0 %958
  %962 = vrot.lane.b32.xlu0 %v950, 64
  %v963 = vpop.permute.xlu0 %962
  %964 = vrot.lane.b32.xlu0 %v951, 64
  %v965 = vpop.permute.xlu0 %964
  %v968 = vsel %vm231, %v950, %v957
  %v969 = vsel %vm231, %v951, %v959
  %v970 = vsel %vm349, %v968, %v963
  %v971 = vsel %vm349, %v969, %v965
  %972 = vst.msk [vmem:[%s10 + $0x10] sm:$0xff] %vm133, %v970
  %973 = vst.msk [vmem:[%s10 + $0x18] sm:$0xff] %vm133, %v971
  // Predicated region
  $region42: #{aittala_gcn1d_block.1} parent=0 // pred_check
    _
  $region43: #{aittala_gcn1d_block.1} parent=0 // pred_check_branch
    %975 = sbr.rel (0) target = $region45
  $region44: #{aittala_gcn1d_block.1} parent=0 // pred_region
    _
  $region45: #{aittala_gcn1d_block.1} parent=0 // pred_fallthru
    _
  // Predicated region
  $region46: #{aittala_gcn1d_block.1} parent=0 // pred_check
    _
  $region47: #{aittala_gcn1d_block.1} parent=0 // pred_check_branch
    %977 = sbr.rel (0) target = $region49
  $region48: #{aittala_gcn1d_block.1} parent=0 // pred_region
    _
  $region49: #{aittala_gcn1d_block.1} parent=0 // pred_fallthru
    _

</llo_original>
